<compile_context>
chip_gen: v7x
topology: tpu7x:2x2x1
jax: 0.10.0
libtpu: 0.0.40
codegen_flags: <defaults>
</compile_context>

<pallas_src>
import functools

import jax
import jax.numpy as jnp
from jax.experimental import pallas as pl
from jax.experimental.pallas import tpu as pltpu


def _round_up(x, m):
    return (x + m - 1) // m * m


# --------------------------------------------------------------------------
# Kernel 1: tiled matmul for user aggregation  (n_users, n_ent) @ (n_ent, D)
# --------------------------------------------------------------------------
def _matmul_kernel(a_ref, b_ref, o_ref, acc_ref):
    @pl.when(pl.program_id(1) == 0)
    def _():
        acc_ref[...] = jnp.zeros_like(acc_ref)

    # A is stored bf16 in HBM (0/1 entries are exact); upcast in-register so
    # numerics match the f32 reference.  The kernel is HBM-bound, so the cast
    # is hidden under the DMA.
    acc_ref[...] += jnp.dot(a_ref[...].astype(jnp.float32), b_ref[...],
                            preferred_element_type=jnp.float32)

    @pl.when(pl.program_id(1) == pl.num_programs(1) - 1)
    def _():
        o_ref[...] = acc_ref[...]


def interact_aggregate(interact_mat_bf16, entity_emb, *, tm=512, tk=1024):
    """user_agg = interact_mat @ entity_emb, streamed/tiled over (M, K)."""
    M, K = interact_mat_bf16.shape
    Kb, D = entity_emb.shape
    assert Kb == K

    # Tile sizes: respect the (8,128) rule, shrink for small problems, pad up.
    tm = min(tm, _round_up(M, 8))
    tk = min(tk, _round_up(K, 128))
    Mp, Kp = _round_up(M, tm), _round_up(K, tk)

    a = interact_mat_bf16
    if (Mp, Kp) != (M, K):
        a = jnp.pad(a, ((0, Mp - M), (0, Kp - K)))
    b = entity_emb
    if Kp != K:
        b = jnp.pad(b, ((0, Kp - K), (0, 0)))

    grid = (Mp // tm, Kp // tk)
    out = pl.pallas_call(
        _matmul_kernel,
        out_shape=jax.ShapeDtypeStruct((Mp, D), jnp.float32),
        grid_spec=pltpu.PrefetchScalarGridSpec(
            num_scalar_prefetch=0,
            grid=grid,
            in_specs=[pl.BlockSpec((tm, tk), lambda i, k: (i, k)),
                      pl.BlockSpec((tk, D), lambda i, k: (k, 0))],
            out_specs=pl.BlockSpec((tm, D), lambda i, k: (i, 0)),
            scratch_shapes=[pltpu.VMEM((tm, D), jnp.float32)]),
        compiler_params=pltpu.CompilerParams(
            dimension_semantics=("parallel", "arbitrary"),
            vmem_limit_bytes=32 * 1024 * 1024),
        cost_estimate=pl.CostEstimate(
            flops=2 * Mp * Kp * D,
            transcendentals=0,
            bytes_accessed=2 * Mp * Kp + 4 * Kp * D + 4 * Mp * D),
    )(a, b)
    return out[:M]


# --------------------------------------------------------------------------
# Kernel 2: BPR loss (create_bpr_loss), tiled over the batch
# --------------------------------------------------------------------------
def _bpr_loss_kernel(u_ref, pos_ref, neg_ref, out_ref, acc_ref,
                     *, decay, batch_size, tb):
    i = pl.program_id(0)

    @pl.when(i == 0)
    def _():
        acc_ref[0, 0] = 0.0   # sum of log-sigmoid terms
        acc_ref[0, 1] = 0.0   # sum of squared norms

    u = u_ref[...]            # (tb, D)
    p = pos_ref[...]
    n = neg_ref[...]

    # Mask rows that are batch padding.
    row = i * tb + jax.lax.broadcasted_iota(jnp.int32, (tb, 1), 0)
    valid = (row < batch_size).astype(jnp.float32)

    # pos_scores - neg_scores == sum(u * (p - n)): one multiply+reduce pair
    # instead of two (D=32 only fills a quarter of the lanes, so halving the
    # elementwise + XLU work matters).
    x = jnp.sum(u * (p - n), axis=1, keepdims=True)          # (tb, 1)
    # numerically stable log-sigmoid(x) = min(x, 0) - log1p(exp(-|x|))
    logsig = jnp.minimum(x, 0.0) - jnp.log1p(jnp.exp(-jnp.abs(x)))
    reg = jnp.sum((u * u + p * p + n * n) * valid)

    acc_ref[0, 0] += jnp.sum(logsig * valid)
    acc_ref[0, 1] += reg

    @pl.when(i == pl.num_programs(0) - 1)
    def _():
        mf_loss = -acc_ref[0, 0] / batch_size
        emb_loss = decay * (0.5 * acc_ref[0, 1]) / batch_size
        out_ref[0, 0] = mf_loss + emb_loss
        out_ref[0, 1] = mf_loss
        out_ref[0, 2] = emb_loss


def create_bpr_loss(u_e, pos_e, neg_e, decay, *, tb=512):
    B, D = u_e.shape
    tb = min(tb, _round_up(B, 8))
    Bp = _round_up(B, tb)
    if Bp != B:
        pad = ((0, Bp - B), (0, 0))
        u_e = jnp.pad(u_e, pad)
        pos_e = jnp.pad(pos_e, pad)
        neg_e = jnp.pad(neg_e, pad)

    out = pl.pallas_call(
        functools.partial(_bpr_loss_kernel, decay=float(decay),
                          batch_size=B, tb=tb),
        out_shape=jax.ShapeDtypeStruct((1, 3), jnp.float32),
        grid_spec=pltpu.PrefetchScalarGridSpec(
            num_scalar_prefetch=0,
            grid=(Bp // tb,),
            in_specs=[pl.BlockSpec((tb, D), lambda i: (i, 0))] * 3,
            out_specs=pl.BlockSpec(memory_space=pltpu.MemorySpace.SMEM),
            scratch_shapes=[pltpu.SMEM((1, 2), jnp.float32)]),
        compiler_params=pltpu.CompilerParams(
            dimension_semantics=("arbitrary",)),
    )(u_e, pos_e, neg_e)
    return out[0, 0], out[0, 1], out[0, 2]


# --------------------------------------------------------------------------
# GCN stand-in (glue + Pallas matmul for the user-aggregation hot path)
# --------------------------------------------------------------------------
def gcn_forward(user_emb, entity_emb, relation_emb, edge_index, edge_type,
                interact_mat_bf16, n_hops):
    head = edge_index[0]
    tail = edge_index[1]
    n_entities = entity_emb.shape[0]

    # Entity propagation does not depend on the user side, so run all hops
    # first and accumulate the *pre-update* entity states.  Because each
    # per-hop user aggregation uses the pre-update entity embeddings and the
    # per-hop user results are summed, the n_hops interact_mat matmuls
    # collapse (by linearity) into ONE matmul against the summed pre-hop
    # states: interact_mat is streamed from HBM once instead of n_hops times.
    e = entity_emb
    entity_res = entity_emb
    pre_hop_sum = jnp.zeros_like(entity_emb)
    for _ in range(n_hops):
        pre_hop_sum = pre_hop_sum + e
        neigh = e[tail] * relation_emb[edge_type]   # relation-weighted messages
        e = jax.ops.segment_sum(neigh, head, num_segments=n_entities)
        entity_res = entity_res + e

    user_res = user_emb + interact_aggregate(interact_mat_bf16, pre_hop_sum)
    return entity_res, user_res


# --------------------------------------------------------------------------
# Recommender.forward
# --------------------------------------------------------------------------
def recommender_forward(all_embed, relation_emb, interact_mat, edge_index,
                        edge_type, users, pos_items, neg_items,
                        *, n_users, context_hops, decay):
    user_emb = all_embed[:n_users, :]
    item_emb = all_embed[n_users:, :]

    # node_dropout / mess_dropout disabled (deterministic eval-style forward).
    # interact_mat values are 0/1 here (exactly representable) -> stream bf16.
    # TODO(synk): if the adjacency carries degree-normalized float weights that
    #             need >bf16 precision, keep f32 (bandwidth win is then lost).
    interact_mat_bf16 = interact_mat.astype(jnp.bfloat16)

    entity_gcn_emb, user_gcn_emb = gcn_forward(
        user_emb, item_emb, relation_emb, edge_index, edge_type,
        interact_mat_bf16, context_hops)

    u_e = user_gcn_emb[users]
    pos_e = entity_gcn_emb[pos_items]
    neg_e = entity_gcn_emb[neg_items]

    return create_bpr_loss(u_e, pos_e, neg_e, decay)


# --------------------------------------------------------------------------
if __name__ == "__main__":
    # small, module-consistent config
    n_users, n_items, n_entities = 8, 12, 16
    n_nodes = n_users + n_entities          # 24
    emb_size = 32
    n_relations = 4
    n_edges = 32
    context_hops = 2
    batch = 4
    decay = 1e-5

    key = jax.random.PRNGKey(0)
    ks = jax.random.split(key, 8)

    # xavier_uniform init for all_embed, matching nn.init.xavier_uniform_
    bound = (6.0 / (n_nodes + emb_size)) ** 0.5
    all_embed = jax.random.uniform(ks[0], (n_nodes, emb_size), jnp.float32,
                                   -bound, bound)
    rel_bound = (6.0 / (n_relations + emb_size)) ** 0.5
    relation_emb = jax.random.uniform(ks[1], (n_relations, emb_size),
                                      jnp.float32, -rel_bound, rel_bound)

    interact_mat = (jax.random.uniform(ks[2], (n_users, n_entities))
                    < 0.3).astype(jnp.float32)
    edge_index = jax.random.randint(ks[3], (2, n_edges), 0, n_entities)
    edge_type = jax.random.randint(ks[4], (n_edges,), 0, n_relations)

    users = jax.random.randint(ks[5], (batch,), 0, n_users)
    pos_items = jax.random.randint(ks[6], (batch,), 0, n_entities)
    neg_items = jax.random.randint(ks[7], (batch,), 0, n_entities)

    loss, rec_loss, reg_loss = recommender_forward(
        all_embed, relation_emb, interact_mat, edge_index, edge_type,
        users, pos_items, neg_items,
        n_users=n_users, context_hops=context_hops, decay=decay)

    jax.block_until_ready((loss, rec_loss, reg_loss))
    assert jnp.isfinite(loss) and jnp.isfinite(rec_loss) and jnp.isfinite(reg_loss)
    print("KERNEL_OK")
</pallas_src>

<mosaic_0001>
module attributes {stable_mosaic.version = 11 : i64} {
  func.func @_matmul_kernel(%arg0: i32, %arg1: i32, %arg2: memref<8x128xbf16, #tpu.memory_space<vmem>>, %arg3: memref<128x32xf32, #tpu.memory_space<vmem>>, %arg4: memref<8x32xf32, #tpu.memory_space<vmem>>, %arg5: memref<8x32xf32, #tpu.memory_space<vmem>>) attributes {dimension_semantics = [#tpu.dimension_semantics<parallel>, #tpu.dimension_semantics<arbitrary>], iteration_bounds = array<i64: 1, 1>, scalar_prefetch = 0 : i64, scratch_operands = 1 : i64, tpu.core_type = #tpu.core_type<tc>, window_params = [{transform_indices = @transform_0, window_bounds = array<i64: 8, 128>}, {transform_indices = @transform_1, window_bounds = array<i64: 128, 32>}, {transform_indices = @transform_2, window_bounds = array<i64: 8, 32>}]} {
    %c0_i32 = arith.constant 0 : i32
    %0 = arith.cmpi eq, %arg1, %c0_i32 : i32
    %1 = arith.extui %0 : i1 to i32
    %c0_i32_0 = arith.constant 0 : i32
    %2 = arith.cmpi ne, %1, %c0_i32_0 : i32
    scf.if %2 {
      %cst_10 = arith.constant 0.000000e+00 : f32
      %13 = vector.broadcast %cst_10 : f32 to vector<8x32xf32>
      %c0_11 = arith.constant 0 : index
      %c0_12 = arith.constant 0 : index
      %14 = vector.load %arg5[%c0_11, %c0_12] : memref<8x32xf32, #tpu.memory_space<vmem>>, vector<8x32xf32>
      tpu.vector_store %arg5[%c0_11, %c0_12], %13 {strides = array<i32>} : memref<8x32xf32, #tpu.memory_space<vmem>>, vector<8x32xf32>,
    } else {
    }
    %c0 = arith.constant 0 : index
    %c0_1 = arith.constant 0 : index
    %3 = vector.load %arg5[%c0, %c0_1] : memref<8x32xf32, #tpu.memory_space<vmem>>, vector<8x32xf32>
    %c0_2 = arith.constant 0 : index
    %c0_3 = arith.constant 0 : index
    %4 = vector.load %arg2[%c0_2, %c0_3] : memref<8x128xbf16, #tpu.memory_space<vmem>>, vector<8x128xbf16>
    %5 = arith.extf %4 : vector<8x128xbf16> to vector<8x128xf32>
    %c0_4 = arith.constant 0 : index
    %c0_5 = arith.constant 0 : index
    %6 = vector.load %arg3[%c0_4, %c0_5] : memref<128x32xf32, #tpu.memory_space<vmem>>, vector<128x32xf32>
    %cst = arith.constant dense<0.000000e+00> : vector<8x32xf32>
    %7 = tpu.matmul %5, %6, %cst {dimension_numbers = #tpu.dot_dimension_numbers<[1], [0], [0], [1], [0, 0, 1, 1], [], []>} : vector<8x128xf32>, vector<128x32xf32>, vector<8x32xf32> -> vector<8x32xf32>
    %8 = arith.addf %3, %7 : vector<8x32xf32>
    %c0_6 = arith.constant 0 : index
    %c0_7 = arith.constant 0 : index
    %9 = vector.load %arg5[%c0_6, %c0_7] : memref<8x32xf32, #tpu.memory_space<vmem>>, vector<8x32xf32>
    tpu.vector_store %arg5[%c0_6, %c0_7], %8 {strides = array<i32>} : memref<8x32xf32, #tpu.memory_space<vmem>>, vector<8x32xf32>,
    %c0_i32_8 = arith.constant 0 : i32
    %10 = arith.cmpi eq, %arg1, %c0_i32_8 : i32
    %11 = arith.extui %10 : i1 to i32
    %c0_i32_9 = arith.constant 0 : i32
    %12 = arith.cmpi ne, %11, %c0_i32_9 : i32
    scf.if %12 {
      %c0_10 = arith.constant 0 : index
      %c0_11 = arith.constant 0 : index
      %13 = vector.load %arg5[%c0_10, %c0_11] : memref<8x32xf32, #tpu.memory_space<vmem>>, vector<8x32xf32>
      %c0_12 = arith.constant 0 : index
      %c0_13 = arith.constant 0 : index
      %14 = vector.load %arg4[%c0_12, %c0_13] : memref<8x32xf32, #tpu.memory_space<vmem>>, vector<8x32xf32>
      tpu.vector_store %arg4[%c0_12, %c0_13], %13 {strides = array<i32>} : memref<8x32xf32, #tpu.memory_space<vmem>>, vector<8x32xf32>,
    } else {
    }
    return
  }
  func.func @transform_0(%arg0: i32, %arg1: i32) -> (i32, i32) {
    %c0_i32 = arith.constant 0 : i32
    return %arg0, %arg1 : i32, i32
  }
  func.func @transform_1(%arg0: i32, %arg1: i32) -> (i32, i32) {
    %c0_i32 = arith.constant 0 : i32
    %c0_i32_0 = arith.constant 0 : i32
    return %arg1, %c0_i32 : i32, i32
  }
  func.func @transform_2(%arg0: i32, %arg1: i32) -> (i32, i32) {
    %c0_i32 = arith.constant 0 : i32
    %c0_i32_0 = arith.constant 0 : i32
    return %arg0, %c0_i32 : i32, i32
  }
}

</mosaic_0001>

<llo_original>
// kernel: tpu_custom_call.1
$region0: #{tpu_custom_call.1}
  #allocation0 [shape = 'u32[]', space=smem, size = 0x4, offset = 0x4, fixed_abs, tag = 'smem constant byte address 0x4 - core index']
  #allocation1 [shape = 'u32[144,128]{1,0:T(1,128)}', space=vmem, size = 0x12000, scoped, tag = 'internal scratch']
  #allocation2 [shape = 'f32[8,32]{1,0:T(8,128)}', space=vmem, size = 0x1000, scoped, tag = 'scratch operand']
  %s0 = inlined_call_operand.vmem [shape: bf16[8,128], index: 0, kind: input, shape index: {}]
  %s1 = inlined_call_operand.vmem [shape: f32[128,32], index: 1, kind: input, shape index: {}]
  %s2 = inlined_call_operand.hbm [shape: f32[8,32], index: 2, kind: output, shape index: {}]
  %s3 = sld [smem:[#allocation0]]
  $region26: #{tpu_custom_call.1} parent=0
    _
  %s5 = ssub.s32 1, %s3
  %s6 = scalar_select 0, %s5, %s3
  $region1: #{tpu_custom_call.1} parent=0
    #allocation3 [shape = 'u8[4096]{0}', space=vmem, size = 0x1000, scoped, tag = 'output window, operand 0, single buffered']
    #allocation4 [shape = 's32[1]{0}', space=sflag, size = 0x4, scoped, tag = 'scoped memory for tpu_custom_call.1']
    %7 = vsyncpa [#allocation4], 0
    // Predicated region
    $region2: #{tpu_custom_call.1} parent=1 // pred_check
      _
    $region3: #{tpu_custom_call.1} parent=1 // pred_check_branch
      %9 = sbr.rel (0) target = $region5
    $region4: #{tpu_custom_call.1} parent=1 // pred_region
      _
    $region5: #{tpu_custom_call.1} parent=1 // pred_fallthru
      _
    // Predicated region
    $region6: #{tpu_custom_call.1} parent=1 // pred_check
      _
    $region7: #{tpu_custom_call.1} parent=1 // pred_check_branch
      %11 = sbr.rel (0) target = $region9
    $region8: #{tpu_custom_call.1} parent=1 // pred_region
      _
    $region9: #{tpu_custom_call.1} parent=1 // pred_fallthru
      _
    %p12 = scmp.eq.s32.totalorder 0, 0
    // Predicated region
    $region10: #{tpu_custom_call.1} parent=1 // pred_check
      %p13 = pneg %p12
    $region11: #{tpu_custom_call.1} parent=1 // pred_check_branch
      %15 = sbr.rel (%p13) target = $region13
    $region12: #{tpu_custom_call.1} parent=1 // pred_region
      %vm16 = vcmask 261120
      %17 = vst.msk [vmem:[#allocation2] sm:$0xff] %vm16, 0.0
    $region13: #{tpu_custom_call.1} parent=1 // pred_fallthru
      _
    %v18 = vld [vmem:[#allocation2] sm:$0xff]
    %v19 = vld [vmem:[%s0] sm:$0xf]
    %v20 = vunpack.c.l.bf16 %v19
    %v21 = vld [vmem:[%s1] sm:$0xff]
    %v22 = vld [vmem:[%s1 + $0x8] sm:$0xff]
    %v23 = vld [vmem:[%s1 + $0x10] sm:$0xff]
    %v24 = vld [vmem:[%s1 + $0x18] sm:$0xff]
    %v25 = vld [vmem:[%s1 + $0x20] sm:$0xff]
    %v26 = vld [vmem:[%s1 + $0x28] sm:$0xff]
    %v27 = vld [vmem:[%s1 + $0x30] sm:$0xff]
    %v28 = vld [vmem:[%s1 + $0x38] sm:$0xff]
    %v29 = vld [vmem:[%s1 + $0x40] sm:$0xff]
    %v30 = vld [vmem:[%s1 + $0x48] sm:$0xff]
    %v31 = vld [vmem:[%s1 + $0x50] sm:$0xff]
    %v32 = vld [vmem:[%s1 + $0x58] sm:$0xff]
    %v33 = vld [vmem:[%s1 + $0x60] sm:$0xff]
    %v34 = vld [vmem:[%s1 + $0x68] sm:$0xff]
    %v35 = vld [vmem:[%s1 + $0x70] sm:$0xff]
    %v36 = vld [vmem:[%s1 + $0x78] sm:$0xff]
    %37 = vmatprep.subr.mxu0 0.0
    %38 = vmatpush1.msra.mxu0 %v21
    %39 = vmatprep.subr.mxu0 0.0
    %40 = vmatpush1.msra.mxu0 %v22
    %41 = vmatprep.subr.mxu0 0.0
    %42 = vmatpush1.msra.mxu0 %v23
    %43 = vmatprep.subr.mxu0 0.0
    %44 = vmatpush1.msra.mxu0 %v24
    %45 = vmatprep.subr.mxu0 0.0
    %46 = vmatpush1.msra.mxu0 %v25
    %47 = vmatprep.subr.mxu0 0.0
    %48 = vmatpush1.msra.mxu0 %v26
    %49 = vmatprep.subr.mxu0 0.0
    %50 = vmatpush1.msra.mxu0 %v27
    %51 = vmatprep.subr.mxu0 0.0
    %52 = vmatpush1.msra.mxu0 %v28
    %53 = vmatprep.subr.mxu0 0.0
    %54 = vmatpush1.msra.mxu0 %v29
    %55 = vmatprep.subr.mxu0 0.0
    %56 = vmatpush1.msra.mxu0 %v30
    %57 = vmatprep.subr.mxu0 0.0
    %58 = vmatpush1.msra.mxu0 %v31
    %59 = vmatprep.subr.mxu0 0.0
    %60 = vmatpush1.msra.mxu0 %v32
    %61 = vmatprep.subr.mxu0 0.0
    %62 = vmatpush1.msra.mxu0 %v33
    %63 = vmatprep.subr.mxu0 0.0
    %64 = vmatpush1.msra.mxu0 %v34
    %65 = vmatprep.subr.mxu0 0.0
    %66 = vmatpush1.msra.mxu0 %v35
    %67 = vmatprep.subr.mxu0 0.0
    %68 = vmatpush1.msra.mxu0 %v36
    %69 = vmatprep.subr.mxu0 0.0
    %70 = vmatpush1.msra.mxu0 0.0
    %71 = vmatprep.subr.mxu0 0.0
    %72 = vmatpush1.msra.mxu0 0.0
    %73 = vmatprep.subr.mxu0 0.0
    %74 = vmatpush1.msra.mxu0 0.0
    %75 = vmatprep.subr.mxu0 0.0
    %76 = vmatpush1.msra.mxu0 0.0
    %77 = vmatprep.subr.mxu0 0.0
    %78 = vmatpush1.msra.mxu0 0.0
    %79 = vmatprep.subr.mxu0 0.0
    %80 = vmatpush1.msra.mxu0 0.0
    %81 = vmatprep.subr.mxu0 0.0
    %82 = vmatpush1.msra.mxu0 0.0
    %83 = vmatprep.subr.mxu0 0.0
    %84 = vmatpush1.msra.mxu0 0.0
    %85 = vmatprep.subr.mxu0 0.0
    %86 = vmatpush1.msra.mxu0 0.0
    %87 = vmatprep.subr.mxu0 0.0
    %88 = vmatpush1.msra.mxu0 0.0
    %89 = vmatprep.subr.mxu0 0.0
    %90 = vmatpush1.msra.mxu0 0.0
    %91 = vmatprep.subr.mxu0 0.0
    %92 = vmatpush1.msra.mxu0 0.0
    %93 = vmatprep.subr.mxu0 0.0
    %94 = vmatpush1.msra.mxu0 0.0
    %95 = vmatprep.subr.mxu0 0.0
    %96 = vmatpush1.msra.mxu0 0.0
    %97 = vmatprep.subr.mxu0 0.0
    %98 = vmatpush1.msra.mxu0 0.0
    %99 = vmatprep.subr.mxu0 0.0
    %100 = vmatpush1.msra.mxu0 0.0
    %101 = vmatprep.mubr.f32.mxu0 0.0
    %102 = vmatmul.mubr.f32.gmra.mrb[0].mxu0 %v20
    %v103 = vpop.f32.mrb[0].mxu0
    %v104 = vadd.f32 0.0, %v103
    %v105 = vpop.f32.mrb[0].mxu0
    %106 = vdwg.mxu0
    %v107 = vadd.f32 %v18, %v104
    %vm108 = vcmask 261120
    %109 = vst.msk [vmem:[#allocation2] sm:$0xff] %vm108, %v107
    // Predicated region
    $region14: #{tpu_custom_call.1} parent=1 // pred_check
      %p110 = pneg %p12
    $region15: #{tpu_custom_call.1} parent=1 // pred_check_branch
      %112 = sbr.rel (%p110) target = $region17
    $region16: #{tpu_custom_call.1} parent=1 // pred_region
      %v113 = vld [vmem:[#allocation2] sm:$0xff]
      %114 = vst.msk [vmem:[#allocation3] sm:$0xff] %vm108, %v113
    $region17: #{tpu_custom_call.1} parent=1 // pred_fallthru
      _
    // Predicated region
    $region18: #{tpu_custom_call.1} parent=1 // pred_check
      _
    $region19: #{tpu_custom_call.1} parent=1 // pred_check_branch
      %116 = sbr.rel (0) target = $region21
    $region20: #{tpu_custom_call.1} parent=1 // pred_region
      %s118 = ssub.s32 128, 128
      %119 = vsyncadd [#allocation4], %s118
      %s121 = sshll.u32 [#allocation3], 4
      %s122 = int_to_ptr.vmem [resolvable:$true] %s121
      %124 = dma.vmem_to_hbm [thread:$0]  %s122, 128, %s2, [#allocation4]
    $region21: #{tpu_custom_call.1} parent=1 // pred_fallthru
      _
    // Predicated region
    $region22: #{tpu_custom_call.1} parent=1 // pred_check
      _
    $region23: #{tpu_custom_call.1} parent=1 // pred_check_branch
      %126 = sbr.rel (0) target = $region25
    $region24: #{tpu_custom_call.1} parent=1 // pred_region
      %127 = dma.done [#allocation4], 128
    $region25: #{tpu_custom_call.1} parent=1 // pred_fallthru
      _
    %128 = vsyncpa [#allocation4], 1

</llo_original>
